<compile_context>
chip_gen: v6e
topology: v6e:2x2x1
jax: 0.10.0
libtpu: 0.0.40
codegen_flags: <defaults>
</compile_context>

<pallas_src>
import numpy as np

import jax
import jax.numpy as jnp
from jax.experimental import pallas as pl
from jax.experimental.pallas import tpu as pltpu


def _round_up(x, m):
    return (x + m - 1) // m * m


# --------------------------------------------------------------------------
# Kernel 1: grouped per-relation message GEMM.
#   h_ref  : (Et, Fi)  edge-source features for one tile (single relation)
#   w_ref  : (Fi, Fo)  weight of that tile's relation (picked via prefetch)
#   msg_ref: (Et, Fo)  messages for this tile
# --------------------------------------------------------------------------
def _msg_kernel(tile_rel_ref, h_ref, w_ref, msg_ref):
    # tile_rel_ref (SMEM scalar prefetch) is consumed only by the index_maps.
    msg_ref[...] = jnp.dot(
        h_ref[...], w_ref[...], preferred_element_type=jnp.float32
    ).astype(msg_ref.dtype)


# --------------------------------------------------------------------------
# Kernel 2: tiled scatter-add via in-VMEM one-hot tiles + fused ReLU.
#   grid = (node_tiles [parallel], edge_tiles [arbitrary / reduction])
#   tgt_ref: (1, Et) int32 target node index per edge (sentinel for padding)
#   msg_ref: (Et, Fo) messages
#   out_ref: (Nt, Fo) resident output block (accumulated across edge tiles)
# --------------------------------------------------------------------------
def _scatter_relu_kernel(tgt_ref, msg_ref, out_ref):
    n = pl.program_id(0)
    e = pl.program_id(1)
    nt = out_ref.shape[0]
    et = msg_ref.shape[0]

    # Build the (Nt, Et) 0/1 scatter tile in VMEM from the int32 indices.
    row_ids = n * nt + jax.lax.broadcasted_iota(jnp.int32, (nt, et), 0)
    onehot = (row_ids == tgt_ref[...]).astype(msg_ref.dtype)
    contrib = jnp.dot(onehot, msg_ref[...], preferred_element_type=jnp.float32)

    @pl.when(e == 0)
    def _():
        out_ref[...] = contrib

    @pl.when(e != 0)
    def _():
        out_ref[...] = out_ref[...] + contrib

    @pl.when(e == pl.num_programs(1) - 1)
    def _():
        # activation = ReLU; dropout = identity (eval mode)
        out_ref[...] = jnp.maximum(out_ref[...], 0.0)


def rgcn_layer(entity_embeddings, edge_index, edge_type, weight,
               *, edge_tile=128, node_tile=256,
               compute_dtype=jnp.float32):
    """RGCN layer forward.

    entity_embeddings: (N, in_feat) f32
    edge_index:        (2, E) int32   [src; tgt]
    edge_type:         (E,)   int32
    weight:            (R, in_feat, out_feat) f32

    For production graphs pick edge_tile/node_tile against the VMEM budget of
    the target chip (v7x: 64 MiB physical / ~32 MiB scoped default; v5e/v6e:
    128 MiB) and pass compute_dtype=jnp.bfloat16 (accumulation stays f32).
    """
    assert edge_tile % 128 == 0, "edge_tile must be a multiple of 128"
    assert node_tile % 8 == 0, "node_tile must be a multiple of 8"

    N, in_feat = entity_embeddings.shape
    R, _, out_feat = weight.shape

    # ---- host-side preprocessing: sort by relation, pad groups to tiles ----
    ei = np.asarray(edge_index)
    et_np = np.asarray(edge_type)
    order = np.argsort(et_np, kind="stable")
    src_s = ei[0, order].astype(np.int32)
    tgt_s = ei[1, order].astype(np.int32)

    Fi = _round_up(in_feat, 128)            # lane-dense contraction dim
    Fo = _round_up(out_feat, 128)           # lane-dense output dim
    Et = edge_tile
    Nt = min(node_tile, _round_up(N, 8))
    N_pad = _round_up(N, Nt)

    counts = np.bincount(et_np[order], minlength=R)
    tiles_per_rel = -(-counts // Et)        # ceil; empty relations -> 0 tiles
    num_tiles = max(int(tiles_per_rel.sum()), 1)
    Ep = num_tiles * Et

    SENTINEL = N_pad                        # matches no real node row
    src_p = np.zeros((Ep,), np.int32)
    tgt_p = np.full((Ep,), SENTINEL, np.int32)
    tile_rel = np.zeros((num_tiles,), np.int32)
    pos = tile = off = 0
    for r in range(R):
        c = int(counts[r])
        if c == 0:
            continue
        ntiles = int(tiles_per_rel[r])
        src_p[pos:pos + c] = src_s[off:off + c]
        tgt_p[pos:pos + c] = tgt_s[off:off + c]
        tile_rel[tile:tile + ntiles] = r
        pos += ntiles * Et
        tile += ntiles
        off += c

    # ---- device-side operand prep (gather + zero-pad feature dims) ----
    emb = entity_embeddings.astype(compute_dtype)
    if Fi != in_feat:
        emb = jnp.pad(emb, ((0, 0), (0, Fi - in_feat)))
    h_src = jnp.take(emb, jnp.asarray(src_p), axis=0)                 # (Ep, Fi)

    w = weight.astype(compute_dtype)
    w = jnp.pad(w, ((0, 0), (0, Fi - in_feat), (0, Fo - out_feat)))   # (R, Fi, Fo)

    tgt_dev = jnp.asarray(tgt_p).reshape(1, Ep)                       # (1, Ep)
    tile_rel_dev = jnp.asarray(tile_rel)                              # (num_tiles,)

    # ---- pass 1: per-relation grouped GEMM (each edge row touched once) ----
    msg = pl.pallas_call(
        _msg_kernel,
        out_shape=jax.ShapeDtypeStruct((Ep, Fo), compute_dtype),
        grid_spec=pltpu.PrefetchScalarGridSpec(
            num_scalar_prefetch=1,
            grid=(num_tiles,),
            in_specs=[
                pl.BlockSpec((Et, Fi), lambda t, tr: (t, 0)),
                # data-dependent weight pick: relation id of this edge tile
                pl.BlockSpec((pl.Squeezed(), Fi, Fo),
                             lambda t, tr: (tr[t], 0, 0)),
            ],
            out_specs=pl.BlockSpec((Et, Fo), lambda t, tr: (t, 0)),
        ),
        compiler_params=pltpu.CompilerParams(
            dimension_semantics=("parallel",)),
    )(tile_rel_dev, h_src, w)

    # ---- pass 2: single tiled scatter-add (one-hot built in VMEM) + ReLU ----
    out = pl.pallas_call(
        _scatter_relu_kernel,
        out_shape=jax.ShapeDtypeStruct((N_pad, Fo), jnp.float32),
        grid_spec=pltpu.PrefetchScalarGridSpec(
            num_scalar_prefetch=0,
            grid=(N_pad // Nt, num_tiles),
            in_specs=[
                pl.BlockSpec((1, Et), lambda n, e: (0, e)),    # tgt indices
                pl.BlockSpec((Et, Fo), lambda n, e: (e, 0)),   # messages
            ],
            out_specs=pl.BlockSpec((Nt, Fo), lambda n, e: (n, 0)),
        ),
        compiler_params=pltpu.CompilerParams(
            dimension_semantics=("parallel", "arbitrary")),
    )(tgt_dev, msg)

    return out[:N, :out_feat]


def _reference(entity_embeddings, edge_index, edge_type, weight):
    N = entity_embeddings.shape[0]
    R, _, out_feat = weight.shape
    msgs = jnp.zeros((N, out_feat), jnp.float32)
    src, tgt = edge_index[0], edge_index[1]
    for r in range(R):
        m = (edge_type == r).astype(jnp.float32)[:, None]
        msg = (entity_embeddings[src] * m) @ weight[r]
        msgs = msgs.at[tgt].add(msg)
    return jnp.maximum(msgs, 0.0)


if __name__ == "__main__":
    key = jax.random.PRNGKey(0)
    num_entities, in_feat, out_feat = 16, 32, 32
    num_relations, num_edges = 4, 64

    k1, k2, k3, k4 = jax.random.split(key, 4)
    entity_embeddings = jax.random.normal(k1, (num_entities, in_feat), jnp.float32)
    edge_index = jax.random.randint(k2, (2, num_edges), 0, num_entities, jnp.int32)
    edge_type = jax.random.randint(k3, (num_edges,), 0, num_relations, jnp.int32)

    # Xavier-uniform init (deterministic)
    fan_in, fan_out = in_feat * out_feat, num_relations * out_feat
    bound = (6.0 / (fan_in + fan_out)) ** 0.5
    weight = jax.random.uniform(k4, (num_relations, in_feat, out_feat),
                                jnp.float32, -bound, bound)

    out = rgcn_layer(entity_embeddings, edge_index, edge_type, weight)
    out = jax.block_until_ready(out)

    ref = _reference(entity_embeddings, edge_index, edge_type, weight)
    assert out.shape == (num_entities, out_feat)
    assert jnp.allclose(out, ref, atol=1e-4, rtol=1e-4)
    print("KERNEL_OK")
</pallas_src>

<mosaic_0001>
module attributes {stable_mosaic.version = 11 : i64} {
  func.func @_msg_kernel(%arg0: i32, %arg1: memref<4xi32, #tpu.memory_space<smem>>, %arg2: memref<128x128xf32, #tpu.memory_space<vmem>>, %arg3: memref<1x128x128xf32, #tpu.memory_space<vmem>>, %arg4: memref<128x128xf32, #tpu.memory_space<vmem>>) attributes {dimension_semantics = [#tpu.dimension_semantics<parallel>], iteration_bounds = array<i64: 4>, scalar_prefetch = 1 : i64, scratch_operands = 0 : i64, tpu.core_type = #tpu.core_type<tc>, window_params = [{transform_indices = @transform_0, window_bounds = array<i64: 128, 128>}, {transform_indices = @transform_1, window_bounds = array<i64: 1, 128, 128>}, {transform_indices = @transform_2, window_bounds = array<i64: 128, 128>}]} {
    %c0 = arith.constant 0 : index
    %c0_0 = arith.constant 0 : index
    %0 = vector.load %arg2[%c0, %c0_0] : memref<128x128xf32, #tpu.memory_space<vmem>>, vector<128x128xf32>
    %c0_1 = arith.constant 0 : index
    %c0_2 = arith.constant 0 : index
    %c0_3 = arith.constant 0 : index
    %1 = vector.load %arg3[%c0_1, %c0_2, %c0_3] : memref<1x128x128xf32, #tpu.memory_space<vmem>>, vector<1x128x128xf32>
    %2 = vector.shape_cast %1 : vector<1x128x128xf32> to vector<128x128xf32>
    %cst = arith.constant dense<0.000000e+00> : vector<128x128xf32>
    %3 = tpu.matmul %0, %2, %cst {dimension_numbers = #tpu.dot_dimension_numbers<[1], [0], [0], [1], [0, 0, 1, 1], [], []>} : vector<128x128xf32>, vector<128x128xf32>, vector<128x128xf32> -> vector<128x128xf32>
    %c0_4 = arith.constant 0 : index
    %c0_5 = arith.constant 0 : index
    %4 = vector.load %arg4[%c0_4, %c0_5] : memref<128x128xf32, #tpu.memory_space<vmem>>, vector<128x128xf32>
    tpu.vector_store %arg4[%c0_4, %c0_5], %3 {strides = array<i32>} : memref<128x128xf32, #tpu.memory_space<vmem>>, vector<128x128xf32>,
    return
  }
  func.func @transform_0(%arg0: i32, %arg1: memref<4xi32, #tpu.memory_space<smem>>) -> (i32, i32) {
    %c0_i32 = arith.constant 0 : i32
    %c0_i32_0 = arith.constant 0 : i32
    return %arg0, %c0_i32 : i32, i32
  }
  func.func @transform_1(%arg0: i32, %arg1: memref<4xi32, #tpu.memory_space<smem>>) -> (i32, i32, i32) {
    %0 = arith.index_cast %arg0 : i32 to index
    %1 = memref.load %arg1[%0] : memref<4xi32, #tpu.memory_space<smem>>
    %c0_i32 = arith.constant 0 : i32
    %c0_i32_0 = arith.constant 0 : i32
    %c0_i32_1 = arith.constant 0 : i32
    return %1, %c0_i32, %c0_i32_0 : i32, i32, i32
  }
  func.func @transform_2(%arg0: i32, %arg1: memref<4xi32, #tpu.memory_space<smem>>) -> (i32, i32) {
    %c0_i32 = arith.constant 0 : i32
    %c0_i32_0 = arith.constant 0 : i32
    return %arg0, %c0_i32 : i32, i32
  }
}

</mosaic_0001>

<llo_original>
// kernel: tpu_custom_call.1
$region0: #{tpu_custom_call.1}
  #allocation0 [shape = 'u32[]', space=smem, size = 0x4, offset = 0x4, fixed_abs, tag = 'smem constant byte address 0x4 - core index']
  #allocation1 [shape = 'u32[144,128]{1,0:T(1,128)}', space=vmem, size = 0x12000, scoped, tag = 'internal scratch']
  #allocation2 [shape = 's32[1]{0}', space=sflag, size = 0x4, scoped, tag = 'scoped memory for tpu_custom_call.1']
  #allocation3 [shape = 'u8[512]{0}', space=smem, size = 0x200, scoped, tag = 'prefetched SMEM operand 0']
  %s0 = inlined_call_operand.hbm [shape: s32[4], index: 0, kind: input, shape index: {}]
  %s1 = inlined_call_operand.hbm [shape: f32[512,128], index: 1, kind: input, shape index: {}]
  %s2 = inlined_call_operand.hbm [shape: f32[4,128,128], index: 2, kind: input, shape index: {}]
  %s3 = inlined_call_operand.hbm [shape: f32[512,128], index: 3, kind: output, shape index: {}]
  %s4 = sld [smem:[#allocation0]]
  $region49: #{tpu_custom_call.1} parent=0
    _
  %s6 = ssub.s32 1, %s4
  %s7 = scalar_select 0, %s6, %s4
  %9 = dma.hbm_to_smem %s0, 16, [#allocation3], [#allocation2]
  %10 = dma.done [#allocation2], 16
  %11 = sfence
  $region1: #{tpu_custom_call.1} parent=0
    #allocation4 [shape = 'u8[131072]{0}', space=vmem, size = 0x20000, scoped, tag = 'input window, operand 1']
    #allocation5 [shape = 's32[2]{0}', space=sflag, size = 0x8, scoped, tag = 'scoped memory for tpu_custom_call.1']
    #allocation6 [shape = 's32[2]{0}', space=sflag, size = 0x8, scoped, tag = 'scoped memory for tpu_custom_call.1']
    #allocation7 [shape = 'u8[131072]{0}', space=vmem, size = 0x20000, scoped, tag = 'input window, operand 2']
    #allocation8 [shape = 's32[2]{0}', space=sflag, size = 0x8, scoped, tag = 'scoped memory for tpu_custom_call.1']
    #allocation9 [shape = 'u8[131072]{0}', space=vmem, size = 0x20000, scoped, tag = 'output window, operand 0']
    %12 = vsyncpa [#allocation5], 0
    %s13 = scalar_lea.sflag [#allocation5], 1
    %14 = vsyncpa %s13, 0
    %15 = vsyncpa [#allocation8], 0
    %s16 = scalar_lea.sflag [#allocation8], 1
    %17 = vsyncpa %s16, 0
    %18 = vsyncpa [#allocation6], 0
    %s19 = scalar_lea.sflag [#allocation6], 1
    %20 = vsyncpa %s19, 0
    loop: start=0, step=1, limit=6
    $region2: #{tpu_custom_call.1} parent=1 // loop_pre_header
      _
    $region3: #{tpu_custom_call.1} parent=1 // loop_header
      %s22 = sphi 0, %s26
      %p23 = scmp.ge.s32.totalorder %s22, 6
      %s32 = sphi 0, %s34
      %s35 = sphi 0, %s32
      %s36 = sphi 0, %s35
      %s52 = sphi 0, %s36
      %s60 = sphi 0, %s62
      %s63 = sphi 0, %s60
      %s64 = sphi 0, %s63
      %s80 = sphi 0, %s64
      %s86 = sphi 0, %s88
      %s89 = sphi 0, %s86
      %s90 = sphi 0, %s89
      %s106 = sphi 0, %s90
    $region4: #{tpu_custom_call.1} parent=1 // loop_header_branch
      %25 = sbr.rel (%p23) target = $region8
    $region5: #{tpu_custom_call.1} parent=1 // loop_body
      %s27 = ssub.s32 %s22, 1
      %s28 = ssub.s32 %s22, 2
      %s29 = sadd.s32 %s22, 1
      %s30 = ssub.s32 %s22, %s29
      %p31 = scmp.eq.s32.totalorder %s30, 0
      %s33 = sadd.s32 %s32, 1
      %s34 = scalar_select %p31, %s32, %s33
      %p37 = pneg %p31
      %p38 = scmp.eq.s32.totalorder %s22, 3
      %p39 = por %p37, %p38
      %p40 = scmp.ne.s32.totalorder %s32, %s35
      %p41 = scmp.eq.s32.totalorder %s22, 0
      %p42 = por %p40, %p41
      %p43 = scmp.ne.s32.totalorder %s32, %s35
      %p44 = scmp.eq.s32.totalorder %s27, 3
      %p45 = por %p43, %p44
      %p46 = scmp.ne.s32.totalorder %s35, %s36
      %p47 = scmp.eq.s32.totalorder %s27, 0
      %p48 = por %p46, %p47
      %p49 = scmp.ne.s32.totalorder %s35, %s36
      %p50 = scmp.eq.s32.totalorder %s28, 3
      %p51 = por %p49, %p50
      %p53 = scmp.ne.s32.totalorder %s36, %s52
      %p54 = scmp.eq.s32.totalorder %s28, 0
      %p55 = por %p53, %p54
      %s56 = sld [smem:[#allocation3 + %s22]]
      %s57 = sld [smem:[#allocation3 + %s29]]
      %s58 = ssub.s32 %s56, %s57
      %p59 = scmp.eq.s32.totalorder %s58, 0
      %s61 = sadd.s32 %s60, 1
      %s62 = scalar_select %p59, %s60, %s61
      %p65 = pneg %p59
      %p66 = scmp.eq.s32.totalorder %s22, 3
      %p67 = por %p65, %p66
      %p68 = scmp.ne.s32.totalorder %s60, %s63
      %p69 = scmp.eq.s32.totalorder %s22, 0
      %p70 = por %p68, %p69
      %p71 = scmp.ne.s32.totalorder %s60, %s63
      %p72 = scmp.eq.s32.totalorder %s27, 3
      %p73 = por %p71, %p72
      %p74 = scmp.ne.s32.totalorder %s63, %s64
      %p75 = scmp.eq.s32.totalorder %s27, 0
      %p76 = por %p74, %p75
      %p77 = scmp.ne.s32.totalorder %s63, %s64
      %p78 = scmp.eq.s32.totalorder %s28, 3
      %p79 = por %p77, %p78
      %p81 = scmp.ne.s32.totalorder %s64, %s80
      %p82 = scmp.eq.s32.totalorder %s28, 0
      %p83 = por %p81, %p82
      %s84 = ssub.s32 %s22, %s29
      %p85 = scmp.eq.s32.totalorder %s84, 0
      %s87 = sadd.s32 %s86, 1
      %s88 = scalar_select %p85, %s86, %s87
      %p91 = pneg %p85
      %p92 = scmp.eq.s32.totalorder %s22, 3
      %p93 = por %p91, %p92
      %p94 = scmp.ne.s32.totalorder %s86, %s89
      %p95 = scmp.eq.s32.totalorder %s22, 0
      %p96 = por %p94, %p95
      %p97 = scmp.ne.s32.totalorder %s86, %s89
      %p98 = scmp.eq.s32.totalorder %s27, 3
      %p99 = por %p97, %p98
      %p100 = scmp.ne.s32.totalorder %s89, %s90
      %p101 = scmp.eq.s32.totalorder %s27, 0
      %p102 = por %p100, %p101
      %p103 = scmp.ne.s32.totalorder %s89, %s90
      %p104 = scmp.eq.s32.totalorder %s28, 3
      %p105 = por %p103, %p104
      %p107 = scmp.ne.s32.totalorder %s90, %s106
      %p108 = scmp.eq.s32.totalorder %s28, 0
      %p109 = por %p107, %p108
      %p110 = scmp.le.s32.totalorder 1, %s22
      %p111 = scmp.lt.s32.totalorder %s22, 5
      %p112 = pnand %p110, %p111
      %p113 = pneg %p112
      // Predicated region
      $region9: #{tpu_custom_call.1} parent=5 // pred_check
        _
      $region10: #{tpu_custom_call.1} parent=5 // pred_check_branch
        %115 = sbr.rel (%p112) target = $region12
      $region11: #{tpu_custom_call.1} parent=5 // pred_region
        %s116 = ssub.s32 %s22, 1
      $region12: #{tpu_custom_call.1} parent=5 // pred_fallthru
        _
      %p117 = scmp.lt.s32.totalorder %s22, 4
      // Predicated region
      $region13: #{tpu_custom_call.1} parent=5 // pred_check
        %p118 = pneg %p117
      $region14: #{tpu_custom_call.1} parent=5 // pred_check_branch
        %120 = sbr.rel (%p118) target = $region16
      $region15: #{tpu_custom_call.1} parent=5 // pred_region
        // Predicated region
        $region17: #{tpu_custom_call.1} parent=15 // pred_check
          %p121 = pneg %p42
        $region18: #{tpu_custom_call.1} parent=15 // pred_check_branch
          %123 = sbr.rel (%p121) target = $region20
        $region19: #{tpu_custom_call.1} parent=15 // pred_region
          %s124 = sand.u32 %s32, 1
          %s125 = scalar_lea.sflag [#allocation5], %s124
          %s126 = sand.u32 %s32, 1
          %s127 = smul.addr %s126, 128
          %s128 = scalar_lea.vmem [#allocation4], %s127
          %s129 = smul.u32 16, %s22
          %s131 = ssub.s32 2048, 2048
          %132 = vsyncadd %s125, %s131
          %s133 = smul.addr %s129, 128
          %s134 = scalar_lea.hbm %s1, %s133
          %s135 = sshll.u32 %s128, 4
          %s136 = int_to_ptr.vmem [resolvable:$true] %s135
          %141 = dma.hbm_to_vmem [thread:$0]  %s134, 2048, %s136, %s125, 128, 128, 8
        $region20: #{tpu_custom_call.1} parent=15 // pred_fallthru
          _
        // Predicated region
        $region21: #{tpu_custom_call.1} parent=15 // pred_check
          %p142 = pneg %p70
        $region22: #{tpu_custom_call.1} parent=15 // pred_check_branch
          %144 = sbr.rel (%p142) target = $region24
        $region23: #{tpu_custom_call.1} parent=15 // pred_region
          %s145 = sand.u32 %s60, 1
          %s146 = scalar_lea.sflag [#allocation8], %s145
          %s147 = sand.u32 %s60, 1
          %s148 = smul.addr %s147, 128
          %s149 = scalar_lea.vmem [#allocation7], %s148
          %s150 = sld [smem:[#allocation3 + %s22]]
          %s152 = ssub.s32 2048, 2048
          %153 = vsyncadd %s146, %s152
          %s154 = smul.addr %s150, 16
          %s155 = smul.addr %s154, 128
          %s156 = scalar_lea.hbm %s2, %s155
          %s157 = sshll.u32 %s149, 4
          %s158 = int_to_ptr.vmem [resolvable:$true] %s157
          %163 = dma.hbm_to_vmem [thread:$0]  %s156, 2048, %s158, %s146, 128, 128, 8
        $region24: #{tpu_custom_call.1} parent=15 // pred_fallthru
          _
      $region16: #{tpu_custom_call.1} parent=5 // pred_fallthru
        _
      %p164 = scmp.le.s32.totalorder 1, %s22
      %p165 = scmp.lt.s32.totalorder %s22, 5
      %p166 = pnand %p164, %p165
      %p167 = pneg %p166
      // Predicated region
      $region25: #{tpu_custom_call.1} parent=5 // pred_check
        _
      $region26: #{tpu_custom_call.1} parent=5 // pred_check_branch
        %169 = sbr.rel (%p166) target = $region28
      $region27: #{tpu_custom_call.1} parent=5 // pred_region
        %s170 = ssub.s32 %s22, 1
        %s171 = sand.u32 %s35, 1
        %s172 = scalar_lea.sflag [#allocation5], %s171
        %s173 = sand.u32 %s35, 1
        %s174 = smul.addr %s173, 128
        %s175 = scalar_lea.vmem [#allocation4], %s174
        // Predicated region
        $region29: #{tpu_custom_call.1} parent=27 // pred_check
          %p176 = pneg %p48
        $region30: #{tpu_custom_call.1} parent=27 // pred_check_branch
          %178 = sbr.rel (%p176) target = $region32
        $region31: #{tpu_custom_call.1} parent=27 // pred_region
          %179 = dma.done %s172, 2048
        $region32: #{tpu_custom_call.1} parent=27 // pred_fallthru
          _
        %s180 = sand.u32 %s63, 1
        %s181 = scalar_lea.sflag [#allocation8], %s180
        %s182 = sand.u32 %s63, 1
        %s183 = smul.addr %s182, 128
        %s184 = scalar_lea.vmem [#allocation7], %s183
        // Predicated region
        $region33: #{tpu_custom_call.1} parent=27 // pred_check
          %p185 = pneg %p76
        $region34: #{tpu_custom_call.1} parent=27 // pred_check_branch
          %187 = sbr.rel (%p185) target = $region36
        $region35: #{tpu_custom_call.1} parent=27 // pred_region
          %188 = dma.done %s181, 2048
        $region36: #{tpu_custom_call.1} parent=27 // pred_fallthru
          _
        %s189 = sand.u32 %s35, 1
        %s190 = scalar_lea.sflag [#allocation5], %s189
        %s191 = sand.u32 %s35, 1
        %s192 = smul.addr %s191, 128
        %s193 = scalar_lea.vmem [#allocation4], %s192
        %p194 = pneg %p48
        %p195 = pneg %p45
        %s196 = sand.u32 %s63, 1
        %s197 = scalar_lea.sflag [#allocation8], %s196
        %s198 = sand.u32 %s63, 1
        %s199 = smul.addr %s198, 128
        %s200 = scalar_lea.vmem [#allocation7], %s199
        %p201 = pneg %p76
        %p202 = pneg %p73
        %p203 = pneg %p102
        %p204 = pneg %p99
        %s205 = sand.u32 %s89, 1
        %s206 = scalar_lea.sflag [#allocation6], %s205
        %s207 = sand.u32 %s89, 1
        %s208 = smul.addr %s207, 128
        %s209 = scalar_lea.vmem [#allocation9], %s208
        %s210 = smul.u32 16, %s27
        %s211 = sld [smem:[#allocation3 + %s27]]
        %s212 = smul.u32 16, %s27
        %v213 = vld [vmem:[%s175] sm:$0xff]
        %v214 = vld [vmem:[%s175 + $0x8] sm:$0xff]
        %v215 = vld [vmem:[%s175 + $0x10] sm:$0xff]
        %v216 = vld [vmem:[%s175 + $0x18] sm:$0xff]
        %v217 = vld [vmem:[%s175 + $0x20] sm:$0xff]
        %v218 = vld [vmem:[%s175 + $0x28] sm:$0xff]
        %v219 = vld [vmem:[%s175 + $0x30] sm:$0xff]
        %v220 = vld [vmem:[%s175 + $0x38] sm:$0xff]
        %v221 = vld [vmem:[%s175 + $0x40] sm:$0xff]
        %v222 = vld [vmem:[%s175 + $0x48] sm:$0xff]
        %v223 = vld [vmem:[%s175 + $0x50] sm:$0xff]
        %v224 = vld [vmem:[%s175 + $0x58] sm:$0xff]
        %v225 = vld [vmem:[%s175 + $0x60] sm:$0xff]
        %v226 = vld [vmem:[%s175 + $0x68] sm:$0xff]
        %v227 = vld [vmem:[%s175 + $0x70] sm:$0xff]
        %v228 = vld [vmem:[%s175 + $0x78] sm:$0xff]
        %v229 = vld [vmem:[%s184] sm:$0xff]
        %v230 = vld [vmem:[%s184 + $0x8] sm:$0xff]
        %v231 = vld [vmem:[%s184 + $0x10] sm:$0xff]
        %v232 = vld [vmem:[%s184 + $0x18] sm:$0xff]
        %v233 = vld [vmem:[%s184 + $0x20] sm:$0xff]
        %v234 = vld [vmem:[%s184 + $0x28] sm:$0xff]
        %v235 = vld [vmem:[%s184 + $0x30] sm:$0xff]
        %v236 = vld [vmem:[%s184 + $0x38] sm:$0xff]
        %v237 = vld [vmem:[%s184 + $0x40] sm:$0xff]
        %v238 = vld [vmem:[%s184 + $0x48] sm:$0xff]
        %v239 = vld [vmem:[%s184 + $0x50] sm:$0xff]
        %v240 = vld [vmem:[%s184 + $0x58] sm:$0xff]
        %v241 = vld [vmem:[%s184 + $0x60] sm:$0xff]
        %v242 = vld [vmem:[%s184 + $0x68] sm:$0xff]
        %v243 = vld [vmem:[%s184 + $0x70] sm:$0xff]
        %v244 = vld [vmem:[%s184 + $0x78] sm:$0xff]
        %245 = vmatprep.subr.mxu0 0.0
        %246 = vmatpush1.msra.mxu0 %v244
        %247 = vmatprep.subr.mxu0 0.0
        %248 = vmatpush1.msra.mxu0 %v243
        %249 = vmatprep.subr.mxu0 0.0
        %250 = vmatpush1.msra.mxu0 %v242
        %251 = vmatprep.subr.mxu0 0.0
        %252 = vmatpush1.msra.mxu0 %v241
        %253 = vmatprep.subr.mxu0 0.0
        %254 = vmatpush1.msra.mxu0 %v240
        %255 = vmatprep.subr.mxu0 0.0
        %256 = vmatpush1.msra.mxu0 %v239
        %257 = vmatprep.subr.mxu0 0.0
        %258 = vmatpush1.msra.mxu0 %v238
        %259 = vmatprep.subr.mxu0 0.0
        %260 = vmatpush1.msra.mxu0 %v237
        %261 = vmatprep.subr.mxu0 0.0
        %262 = vmatpush1.msra.mxu0 %v236
        %263 = vmatprep.subr.mxu0 0.0
        %264 = vmatpush1.msra.mxu0 %v235
        %265 = vmatprep.subr.mxu0 0.0
        %266 = vmatpush1.msra.mxu0 %v234
        %267 = vmatprep.subr.mxu0 0.0
        %268 = vmatpush1.msra.mxu0 %v233
        %269 = vmatprep.subr.mxu0 0.0
        %270 = vmatpush1.msra.mxu0 %v232
        %271 = vmatprep.subr.mxu0 0.0
        %272 = vmatpush1.msra.mxu0 %v231
        %273 = vmatprep.subr.mxu0 0.0
        %274 = vmatpush1.msra.mxu0 %v230
        %275 = vmatprep.subr.mxu0 0.0
        %276 = vmatpush1.msra.mxu0 %v229
        %277 = vmatprep.subr.mxu0 0.0
        %278 = vmatpush2.msra.mxu0 0.0
        %279 = vmatprep.subr.mxu0 0.0
        %280 = vmatpush2.msra.mxu0 0.0
        %281 = vmatprep.subr.mxu0 0.0
        %282 = vmatpush2.msra.mxu0 0.0
        %283 = vmatprep.subr.mxu0 0.0
        %284 = vmatpush2.msra.mxu0 0.0
        %285 = vmatprep.subr.mxu0 0.0
        %286 = vmatpush2.msra.mxu0 0.0
        %287 = vmatprep.subr.mxu0 0.0
        %288 = vmatpush2.msra.mxu0 0.0
        %289 = vmatprep.subr.mxu0 0.0
        %290 = vmatpush2.msra.mxu0 0.0
        %291 = vmatprep.subr.mxu0 0.0
        %292 = vmatpush2.msra.mxu0 0.0
        %293 = vmatprep.subr.mxu0 0.0
        %294 = vmatpush2.msra.mxu0 0.0
        %295 = vmatprep.subr.mxu0 0.0
        %296 = vmatpush2.msra.mxu0 0.0
        %297 = vmatprep.subr.mxu0 0.0
        %298 = vmatpush2.msra.mxu0 0.0
        %299 = vmatprep.subr.mxu0 0.0
        %300 = vmatpush2.msra.mxu0 0.0
        %301 = vmatprep.subr.mxu0 0.0
        %302 = vmatpush2.msra.mxu0 0.0
        %303 = vmatprep.subr.mxu0 0.0
        %304 = vmatpush2.msra.mxu0 0.0
        %305 = vmatprep.subr.mxu0 0.0
        %306 = vmatpush2.msra.mxu0 0.0
        %307 = vmatprep.subr.mxu0 0.0
        %308 = vmatpush2.msra.mxu0 0.0
        %309 = vmatprep.mubr.f32.mxu0 0.0
        %310 = vmatmul.mubr.f32.gmra.mxu0 %v213
        %v311 = vpop.f32.mrf.mxu0
        %v312 = vadd.f32 0.0, %v311
        %v313 = vpop.f32.mrf.mxu0
        %314 = vmatprep.mubr.f32.mxu0 0.0
        %315 = vmatmul.mubr.f32.gmra.mxu0 %v214
        %v316 = vpop.f32.mrf.mxu0
        %v317 = vadd.f32 0.0, %v316
        %v318 = vpop.f32.mrf.mxu0
        %319 = vmatprep.mubr.f32.mxu0 0.0
        %320 = vmatmul.mubr.f32.gmra.mxu0 %v215
        %v321 = vpop.f32.mrf.mxu0
        %v322 = vadd.f32 0.0, %v321
        %v323 = vpop.f32.mrf.mxu0
        %324 = vmatprep.mubr.f32.mxu0 0.0
        %325 = vmatmul.mubr.f32.gmra.mxu0 %v216
        %v326 = vpop.f32.mrf.mxu0
        %v327 = vadd.f32 0.0, %v326
        %v328 = vpop.f32.mrf.mxu0
        %329 = vmatprep.mubr.f32.mxu0 0.0
        %330 = vmatmul.mubr.f32.gmra.mxu0 %v217
        %v331 = vpop.f32.mrf.mxu0
        %v332 = vadd.f32 0.0, %v331
        %v333 = vpop.f32.mrf.mxu0
        %334 = vmatprep.mubr.f32.mxu0 0.0
        %335 = vmatmul.mubr.f32.gmra.mxu0 %v218
        %v336 = vpop.f32.mrf.mxu0
        %v337 = vadd.f32 0.0, %v336
        %v338 = vpop.f32.mrf.mxu0
        %339 = vmatprep.mubr.f32.mxu0 0.0
        %340 = vmatmul.mubr.f32.gmra.mxu0 %v219
        %v341 = vpop.f32.mrf.mxu0
        %v342 = vadd.f32 0.0, %v341
        %v343 = vpop.f32.mrf.mxu0
        %344 = vmatprep.mubr.f32.mxu0 0.0
        %345 = vmatmul.mubr.f32.gmra.mxu0 %v220
        %v346 = vpop.f32.mrf.mxu0
        %v347 = vadd.f32 0.0, %v346
        %v348 = vpop.f32.mrf.mxu0
        %349 = vmatprep.mubr.f32.mxu0 0.0
        %350 = vmatmul.mubr.f32.gmra.mxu0 %v221
        %v351 = vpop.f32.mrf.mxu0
        %v352 = vadd.f32 0.0, %v351
        %v353 = vpop.f32.mrf.mxu0
        %354 = vmatprep.mubr.f32.mxu0 0.0
        %355 = vmatmul.mubr.f32.gmra.mxu0 %v222
        %v356 = vpop.f32.mrf.mxu0
        %v357 = vadd.f32 0.0, %v356
        %v358 = vpop.f32.mrf.mxu0
        %359 = vmatprep.mubr.f32.mxu0 0.0
        %360 = vmatmul.mubr.f32.gmra.mxu0 %v223
        %v361 = vpop.f32.mrf.mxu0
        %v362 = vadd.f32 0.0, %v361
        %v363 = vpop.f32.mrf.mxu0
        %364 = vmatprep.mubr.f32.mxu0 0.0
        %365 = vmatmul.mubr.f32.gmra.mxu0 %v224
        %v366 = vpop.f32.mrf.mxu0
        %v367 = vadd.f32 0.0, %v366
        %v368 = vpop.f32.mrf.mxu0
        %369 = vmatprep.mubr.f32.mxu0 0.0
        %370 = vmatmul.mubr.f32.gmra.mxu0 %v225
        %v371 = vpop.f32.mrf.mxu0
        %v372 = vadd.f32 0.0, %v371
        %v373 = vpop.f32.mrf.mxu0
        %374 = vmatprep.mubr.f32.mxu0 0.0
        %375 = vmatmul.mubr.f32.gmra.mxu0 %v226
        %v376 = vpop.f32.mrf.mxu0
        %v377 = vadd.f32 0.0, %v376
        %v378 = vpop.f32.mrf.mxu0
        %379 = vmatprep.mubr.f32.mxu0 0.0
        %380 = vmatmul.mubr.f32.gmra.mxu0 %v227
        %v381 = vpop.f32.mrf.mxu0
        %v382 = vadd.f32 0.0, %v381
        %v383 = vpop.f32.mrf.mxu0
        %384 = vmatprep.mubr.f32.mxu0 0.0
        %385 = vmatmul.mubr.f32.gmra.mxu0 %v228
        %v386 = vpop.f32.mrf.mxu0
        %v387 = vadd.f32 0.0, %v386
        %v388 = vpop.f32.mrf.mxu0
        %389 = vdwg.mxu0
        %390 = vst [vmem:[%s209] sm:$0xff] %v312
        %391 = vst [vmem:[%s209 + $0x8] sm:$0xff] %v317
        %392 = vst [vmem:[%s209 + $0x10] sm:$0xff] %v322
        %393 = vst [vmem:[%s209 + $0x18] sm:$0xff] %v327
        %394 = vst [vmem:[%s209 + $0x20] sm:$0xff] %v332
        %395 = vst [vmem:[%s209 + $0x28] sm:$0xff] %v337
        %396 = vst [vmem:[%s209 + $0x30] sm:$0xff] %v342
        %397 = vst [vmem:[%s209 + $0x38] sm:$0xff] %v347
        %398 = vst [vmem:[%s209 + $0x40] sm:$0xff] %v352
        %399 = vst [vmem:[%s209 + $0x48] sm:$0xff] %v357
        %400 = vst [vmem:[%s209 + $0x50] sm:$0xff] %v362
        %401 = vst [vmem:[%s209 + $0x58] sm:$0xff] %v367
        %402 = vst [vmem:[%s209 + $0x60] sm:$0xff] %v372
        %403 = vst [vmem:[%s209 + $0x68] sm:$0xff] %v377
        %404 = vst [vmem:[%s209 + $0x70] sm:$0xff] %v382
        %405 = vst [vmem:[%s209 + $0x78] sm:$0xff] %v387
        %s406 = sand.u32 %s89, 1
        %s407 = scalar_lea.sflag [#allocation6], %s406
        %s408 = sand.u32 %s89, 1
        %s409 = smul.addr %s408, 128
        %s410 = scalar_lea.vmem [#allocation9], %s409
        // Predicated region
        $region37: #{tpu_custom_call.1} parent=27 // pred_check
          %p411 = pneg %p99
        $region38: #{tpu_custom_call.1} parent=27 // pred_check_branch
          %413 = sbr.rel (%p411) target = $region40
        $region39: #{tpu_custom_call.1} parent=27 // pred_region
          %s414 = smul.u32 16, %s27
          %s416 = ssub.s32 2048, 2048
          %417 = vsyncadd %s407, %s416
          %s418 = smul.addr %s414, 128
          %s419 = scalar_lea.hbm %s3, %s418
          %s420 = sshll.u32 %s410, 4
          %s421 = int_to_ptr.vmem [resolvable:$true] %s420
          %426 = dma.vmem_to_hbm [thread:$0]  %s421, 2048, %s419, %s407, 128, 128, 8
        $region40: #{tpu_custom_call.1} parent=27 // pred_fallthru
          _
      $region28: #{tpu_custom_call.1} parent=5 // pred_fallthru
        _
      %p427 = scmp.le.s32.totalorder 2, %s22
      // Predicated region
      $region41: #{tpu_custom_call.1} parent=5 // pred_check
        %p428 = pneg %p427
      $region42: #{tpu_custom_call.1} parent=5 // pred_check_branch
        %430 = sbr.rel (%p428) target = $region44
      $region43: #{tpu_custom_call.1} parent=5 // pred_region
        %s431 = ssub.s32 %s22, 2
        // Predicated region
        $region45: #{tpu_custom_call.1} parent=43 // pred_check
          %p432 = pneg %p105
        $region46: #{tpu_custom_call.1} parent=43 // pred_check_branch
          %434 = sbr.rel (%p432) target = $region48
        $region47: #{tpu_custom_call.1} parent=43 // pred_region
          %s435 = sand.u32 %s90, 1
          %s436 = scalar_lea.sflag [#allocation6], %s435
          %s437 = sand.u32 %s90, 1
          %s438 = smul.addr %s437, 128
          %s439 = scalar_lea.vmem [#allocation9], %s438
          %440 = dma.done %s436, 2048
        $region48: #{tpu_custom_call.1} parent=43 // pred_fallthru
          _
      $region44: #{tpu_custom_call.1} parent=5 // pred_fallthru
        _
    $region6: #{tpu_custom_call.1} parent=1 // loop_footer
      %s26 = sadd.s32 1, %s22
    $region7: #{tpu_custom_call.1} parent=1 // loop_footer_branch
      %21 = sbr.rel target = $region3
    $region8: #{tpu_custom_call.1} parent=1 // loop_exit
      _
    %441 = vsyncpa [#allocation5], 1
    %s442 = scalar_lea.sflag [#allocation5], 1
    %443 = vsyncpa %s442, 1
    %444 = vsyncpa [#allocation8], 1
    %s445 = scalar_lea.sflag [#allocation8], 1
    %446 = vsyncpa %s445, 1
    %447 = vsyncpa [#allocation6], 1
    %s448 = scalar_lea.sflag [#allocation6], 1
    %449 = vsyncpa %s448, 1

</llo_original>
